<compile_context>
chip_gen: v7x
topology: tpu7x:2x2x1
jax: 0.10.0
libtpu: 0.0.40
codegen_flags: <defaults>
</compile_context>

<pallas_src>
import functools

import jax
import jax.numpy as jnp
from jax.experimental import pallas as pl
from jax.experimental.pallas import tpu as pltpu


def _bitwise_kernel(x_ref, y_ref, o_ref):
    x = x_ref[...]
    y = y_ref[...]
    x_sub = x - x * y
    y_add = y + 3 * x
    o_ref[...] = jnp.bitwise_xor(x_sub, y_add)


@functools.partial(jax.jit, static_argnames=())
def bitwise_model(x, y):
    assert x.shape == y.shape and x.dtype == y.dtype
    orig_shape = x.shape
    n = x.size
    itemsize = jnp.dtype(x.dtype).itemsize

    # ---- choose a wide lane-dense layout, avoiding padding when possible ----
    lanes = None
    for cand in (1024, 512, 256, 128):
        if n % cand == 0:
            lanes = cand
            break

    if lanes is not None:
        rows = n // lanes
        x2 = x.reshape(rows, lanes)
        y2 = y.reshape(rows, lanes)
        ragged = False
    else:
        # genuinely ragged: pad flat buffer up to (multiple-of-8 rows, 128)
        lanes = 128
        rows = -(-n // lanes)
        rows = ((rows + 7) // 8) * 8
        padded = rows * lanes
        xf = jnp.pad(x.reshape(-1), (0, padded - n))
        yf = jnp.pad(y.reshape(-1), (0, padded - n))
        x2 = xf.reshape(rows, lanes)
        y2 = yf.reshape(rows, lanes)
        ragged = True

    # ---- tile rows: ~2 MiB per operand tile, double-buffered by Pallas ----
    target_bytes = 2 << 20
    target_rows = max(8, target_bytes // (lanes * itemsize))
    target_rows = (target_rows // 8) * 8  # sublane-aligned

    if rows <= target_rows:
        tr = rows            # single full-array block (shape == array dims)
    else:
        tr = target_rows     # partial trailing block handled by Pallas

    num_blocks = pl.cdiv(rows, tr)

    out2 = pl.pallas_call(
        _bitwise_kernel,
        out_shape=jax.ShapeDtypeStruct((rows, lanes), x.dtype),
        grid=(num_blocks,),
        in_specs=[
            pl.BlockSpec((tr, lanes), lambda i: (i, 0)),
            pl.BlockSpec((tr, lanes), lambda i: (i, 0)),
        ],
        out_specs=pl.BlockSpec((tr, lanes), lambda i: (i, 0)),
        compiler_params=pltpu.CompilerParams(
            dimension_semantics=("parallel",),
            vmem_limit_bytes=32 * 1024 * 1024,
        ),
    )(x2, y2)

    if ragged:
        return out2.reshape(-1)[:n].reshape(orig_shape)
    return out2.reshape(orig_shape)


if __name__ == "__main__":
    key = jax.random.PRNGKey(0)
    kx, ky = jax.random.split(key)
    shape = (2, 4, 16, 16)  # NCHW, small example shape
    x = jax.random.randint(kx, shape, minval=-64, maxval=64, dtype=jnp.int32)
    y = jax.random.randint(ky, shape, minval=-64, maxval=64, dtype=jnp.int32)

    out = bitwise_model(x, y)
    out = jax.block_until_ready(out)

    # Reference check in plain JAX (same semantics as the torch module).
    ref = jnp.bitwise_xor(x - x * y, y + 3 * x)
    assert out.shape == shape and out.dtype == jnp.int32
    assert bool(jnp.all(out == ref))

    print("KERNEL_OK")
</pallas_src>

<mosaic_0001>
module attributes {stable_mosaic.version = 11 : i64} {
  func.func @_bitwise_kernel(%arg0: i32, %arg1: memref<2x1024xi32, #tpu.memory_space<vmem>>, %arg2: memref<2x1024xi32, #tpu.memory_space<vmem>>, %arg3: memref<2x1024xi32, #tpu.memory_space<vmem>>) attributes {dimension_semantics = [#tpu.dimension_semantics<parallel>], iteration_bounds = array<i64: 1>, scalar_prefetch = 0 : i64, scratch_operands = 0 : i64, tpu.core_type = #tpu.core_type<tc>, window_params = [{transform_indices = @transform_0, window_bounds = array<i64: 2, 1024>}, {transform_indices = @transform_1, window_bounds = array<i64: 2, 1024>}, {transform_indices = @transform_2, window_bounds = array<i64: 2, 1024>}]} {
    %c0 = arith.constant 0 : index
    %c0_0 = arith.constant 0 : index
    %0 = vector.load %arg1[%c0, %c0_0] : memref<2x1024xi32, #tpu.memory_space<vmem>>, vector<2x1024xi32>
    %c0_1 = arith.constant 0 : index
    %c0_2 = arith.constant 0 : index
    %1 = vector.load %arg2[%c0_1, %c0_2] : memref<2x1024xi32, #tpu.memory_space<vmem>>, vector<2x1024xi32>
    %2 = arith.muli %0, %1 : vector<2x1024xi32>
    %3 = arith.subi %0, %2 : vector<2x1024xi32>
    %c3_i32 = arith.constant 3 : i32
    %4 = vector.broadcast %c3_i32 : i32 to vector<2x1024xi32>
    %5 = arith.muli %4, %0 : vector<2x1024xi32>
    %6 = arith.addi %1, %5 : vector<2x1024xi32>
    %7 = arith.xori %3, %6 : vector<2x1024xi32>
    %c0_3 = arith.constant 0 : index
    %c0_4 = arith.constant 0 : index
    %8 = vector.load %arg3[%c0_3, %c0_4] : memref<2x1024xi32, #tpu.memory_space<vmem>>, vector<2x1024xi32>
    tpu.vector_store %arg3[%c0_3, %c0_4], %7 {strides = array<i32>} : memref<2x1024xi32, #tpu.memory_space<vmem>>, vector<2x1024xi32>,
    return
  }
  func.func @transform_0(%arg0: i32) -> (i32, i32) {
    %c0_i32 = arith.constant 0 : i32
    %c0_i32_0 = arith.constant 0 : i32
    return %arg0, %c0_i32 : i32, i32
  }
  func.func @transform_1(%arg0: i32) -> (i32, i32) {
    %c0_i32 = arith.constant 0 : i32
    %c0_i32_0 = arith.constant 0 : i32
    return %arg0, %c0_i32 : i32, i32
  }
  func.func @transform_2(%arg0: i32) -> (i32, i32) {
    %c0_i32 = arith.constant 0 : i32
    %c0_i32_0 = arith.constant 0 : i32
    return %arg0, %c0_i32 : i32, i32
  }
}

</mosaic_0001>

<llo_original>
// kernel: bitwise_model.1
$region0: #{bitwise_model.1}
  #allocation0 [shape = 'u32[]', space=smem, size = 0x4, offset = 0x4, fixed_abs, tag = 'smem constant byte address 0x4 - core index']
  #allocation1 [shape = 'u32[144,128]{1,0:T(1,128)}', space=vmem, size = 0x12000, scoped, tag = 'internal scratch']
  %s0 = inlined_call_operand.vmem [shape: s32[2,1024], index: 0, kind: input, shape index: {}]
  %s1 = inlined_call_operand.vmem [shape: s32[2,1024], index: 1, kind: input, shape index: {}]
  %s2 = inlined_call_operand.vmem [shape: s32[2,1024], index: 2, kind: output, shape index: {}]
  %s3 = sld [smem:[#allocation0]]
  $region18: #{bitwise_model.1} parent=0
    _
  %s5 = ssub.s32 1, %s3
  %s6 = scalar_select 0, %s5, %s3
  // Predicated region
  $region2: #{bitwise_model.1} parent=0 // pred_check
    _
  $region3: #{bitwise_model.1} parent=0 // pred_check_branch
    %8 = sbr.rel (0) target = $region5
  $region4: #{bitwise_model.1} parent=0 // pred_region
    _
  $region5: #{bitwise_model.1} parent=0 // pred_fallthru
    _
  // Predicated region
  $region6: #{bitwise_model.1} parent=0 // pred_check
    _
  $region7: #{bitwise_model.1} parent=0 // pred_check_branch
    %10 = sbr.rel (0) target = $region9
  $region8: #{bitwise_model.1} parent=0 // pred_region
    _
  $region9: #{bitwise_model.1} parent=0 // pred_fallthru
    _
  %v11 = vld [vmem:[%s0] sm:$0xff]
  %v12 = vld [vmem:[%s0 + $0x8] sm:$0xff]
  %v13 = vld [vmem:[%s1] sm:$0xff]
  %v14 = vld [vmem:[%s1 + $0x8] sm:$0xff]
  %v15 = vmul.u32 %v11, %v13
  %v16 = vmul.u32 %v12, %v14
  %v17 = vsub.s32 %v11, %v15
  %v18 = vsub.s32 %v12, %v16
  %v19 = vmul.u32 %v11, 3
  %v20 = vmul.u32 %v12, 3
  %v21 = vadd.s32 %v13, %v19
  %v22 = vadd.s32 %v14, %v20
  %v23 = vxor.u32 %v17, %v21
  %v24 = vxor.u32 %v18, %v22
  %25 = vst [vmem:[%s2] sm:$0xff] %v23
  %26 = vst [vmem:[%s2 + $0x8] sm:$0xff] %v24
  // Predicated region
  $region10: #{bitwise_model.1} parent=0 // pred_check
    _
  $region11: #{bitwise_model.1} parent=0 // pred_check_branch
    %28 = sbr.rel (0) target = $region13
  $region12: #{bitwise_model.1} parent=0 // pred_region
    _
  $region13: #{bitwise_model.1} parent=0 // pred_fallthru
    _
  // Predicated region
  $region14: #{bitwise_model.1} parent=0 // pred_check
    _
  $region15: #{bitwise_model.1} parent=0 // pred_check_branch
    %30 = sbr.rel (0) target = $region17
  $region16: #{bitwise_model.1} parent=0 // pred_region
    _
  $region17: #{bitwise_model.1} parent=0 // pred_fallthru
    _

</llo_original>
